<compile_context>
chip_gen: v6e
topology: v6e:2x2x1
jax: 0.10.0
libtpu: 0.0.40
codegen_flags: <defaults>
</compile_context>

<pallas_src>
import jax
import jax.numpy as jnp
from jax import lax
from jax.experimental import pallas as pl
from jax.experimental.pallas import tpu as pltpu

VMEM_LIMIT = 32 * 1024 * 1024   # explicit scoped-VMEM budget (safe on v5e/v6e/v7x)


# ----------------------------- Pallas kernels ------------------------------

def offset_coords_kernel(patch_ref, w_ref, b_ref, base_ref, out_ref):
    # (2KK, Cin*KK) @ (Cin*KK, MT) + bias + base grid -> absolute sampling coords
    out_ref[0] = (
        jnp.dot(w_ref[...], patch_ref[0], preferred_element_type=jnp.float32)
        + b_ref[...] + base_ref[...]
    )


def make_deform_kernel(H, W, K, C_in, C_out, PT):
    KK = K * K
    CW = C_in * W

    def kernel(coords_ref, xh_ref, w_ref, out_ref, stats_ref):
        pt = pl.program_id(1)

        xh = xh_ref[0]                       # (CW, H) bf16; xh[c*W+x, y] = x[c, y, x]
        coords = coords_ref[0]               # (2KK, PT) f32: rows [0:KK]=py, [KK:2KK]=px
        iota_y = lax.broadcasted_iota(jnp.float32, (H, 1), 0)
        iota_x = lax.broadcasted_iota(jnp.float32, (W, 1), 0)

        # hat-function bilinear weights for ALL taps, built in one shot (f32),
        # matching torchvision's zero-padded bilinear_interpolate semantics.
        wy_parts = []
        wx_parts = []
        for t in range(KK):
            py = coords[t:t + 1, :]                                        # (1, PT)
            px = coords[KK + t:KK + t + 1, :]                              # (1, PT)
            wy_parts.append(jnp.maximum(1.0 - jnp.abs(py - iota_y), 0.0))  # (H, PT)
            wx_parts.append(jnp.maximum(1.0 - jnp.abs(px - iota_x), 0.0))  # (W, PT)
        wy_all = jnp.concatenate(wy_parts, axis=1).astype(jnp.bfloat16)    # (H, KK*PT)
        wx_all = jnp.concatenate(wx_parts, axis=1)                         # (W, KK*PT) f32

        # batched MXU matmul #1: contract over y for all taps at once.
        u = jnp.dot(xh, wy_all, preferred_element_type=jnp.float32)        # (CW, KK*PT)

        # x weights replicated over input channels (built ONCE per tile).
        # TODO(synk): on v5e a split x-reduction (grouped lane reduce + (P,Cin)@(Cin,Cout))
        # removes the W-fold FLOP inflation; the folded form is kept for v6e/v7x.
        wx_rep = jnp.concatenate([wx_all] * C_in, axis=0)                  # (CW, KK*PT)
        v = (u * wx_rep).astype(jnp.bfloat16)

        # regroup taps onto the contraction axis (aligned lane slices, PT % 128 == 0)
        # and do ONE matmul against the deform weights for all taps.
        v_big = jnp.concatenate([v[:, t * PT:(t + 1) * PT] for t in range(KK)],
                                axis=0)                                    # (KK*CW, PT)
        y = jnp.dot(w_ref[...], v_big, preferred_element_type=jnp.float32)  # (C_out, PT)

        out_ref[0] = y                        # lane-dense store (pixels on lanes)

        # fused BatchNorm pass 1: per-channel partial sums (revisited accumulator
        # along the "arbitrary" pixel-tile axis).
        @pl.when(pt == 0)
        def _():
            stats_ref[...] = jnp.zeros_like(stats_ref)
        s1 = jnp.sum(y, axis=1, keepdims=True)          # (C_out, 1)
        s2 = jnp.sum(y * y, axis=1, keepdims=True)      # (C_out, 1)
        stats_ref[0] += jnp.concatenate([s1, s2], axis=1)

    return kernel


def bn_relu_kernel(y_ref, scale_ref, shift_ref, o_ref):
    o_ref[0] = jnp.maximum(y_ref[0] * scale_ref[...] + shift_ref[...], 0.0)


# ----------------------------- wrappers ------------------------------------

def _offset_sampling_coords(x, w_off, b_off, K, pad, MT):
    """Offset conv (stride=1) fused with the base grid -> coords (N, 2KK, P)."""
    N, C, H, W = x.shape
    KK = K * K
    P = H * W

    # permute offset-conv output channels to [y0..y(KK-1) | x0..x(KK-1)] so the
    # downstream y/x split is a contiguous slice (free at trace time).
    perm = jnp.concatenate([jnp.arange(0, 2 * KK, 2), jnp.arange(1, 2 * KK, 2)])
    w2 = w_off[perm].reshape(2 * KK, C * KK).astype(jnp.bfloat16)   # row = c*KK + t
    b2 = b_off[perm].reshape(2 * KK, 1).astype(jnp.float32)

    # channel-major im2col with pixels on the lane (last) dim.
    xp = jnp.pad(x, ((0, 0), (0, 0), (pad, pad), (pad, pad)))
    cols = [xp[:, :, i:i + H, j:j + W] for i in range(K) for j in range(K)]
    patches = jnp.stack(cols, axis=2).reshape(N, C * KK, P).astype(jnp.bfloat16)

    # base sampling grid (stride=1, dilation=1), matching the permuted order.
    hflat = jnp.repeat(jnp.arange(H), W).astype(jnp.float32)        # (P,)
    wflat = jnp.tile(jnp.arange(W), H).astype(jnp.float32)
    ii = jnp.repeat(jnp.arange(K), K).astype(jnp.float32)           # (KK,)
    jj = jnp.tile(jnp.arange(K), K).astype(jnp.float32)
    base_y = ii[:, None] + hflat[None, :] - pad                     # (KK, P)
    base_x = jj[:, None] + wflat[None, :] - pad
    base = jnp.concatenate([base_y, base_x], axis=0)                # (2KK, P)

    return pl.pallas_call(
        offset_coords_kernel,
        out_shape=jax.ShapeDtypeStruct((N, 2 * KK, P), jnp.float32),
        grid=(N, P // MT),
        in_specs=[
            pl.BlockSpec((1, C * KK, MT), lambda b, j: (b, 0, j)),
            pl.BlockSpec((2 * KK, C * KK), lambda b, j: (0, 0)),
            pl.BlockSpec((2 * KK, 1), lambda b, j: (0, 0)),
            pl.BlockSpec((2 * KK, MT), lambda b, j: (0, j)),
        ],
        out_specs=pl.BlockSpec((1, 2 * KK, MT), lambda b, j: (b, 0, j)),
        compiler_params=pltpu.CompilerParams(
            dimension_semantics=("parallel", "parallel"),
            vmem_limit_bytes=VMEM_LIMIT),
    )(patches, w2, b2, base)


def deform_conv_layer(x, w_off, b_off, w_def, gamma, beta, *, K, pad, eps=1e-5):
    N, C_in, H, W = x.shape
    C_out = w_def.shape[0]
    KK = K * K
    P = H * W
    CW = C_in * W

    # pixel tile: multiple of 128 -> lane-dense, aligned slices, pipelined grid.
    PT = 128 if P % 128 == 0 else P
    assert P % PT == 0
    n_pt = P // PT

    # ---- 1) offset conv + base grid -> absolute sampling coordinates ----
    coords = _offset_sampling_coords(x, w_off, b_off, K, pad, PT)   # (N, 2KK, P) f32

    # ---- 2) deformable conv (+ fused BN statistics) ----
    xh = jnp.transpose(x, (0, 1, 3, 2)).reshape(N, CW, H).astype(jnp.bfloat16)
    w_tc = jnp.transpose(w_def, (0, 2, 3, 1)).reshape(C_out, KK, C_in)
    # TODO(synk): for very large W/C_out (v7x 64 MiB VMEM) keep w_tc resident and
    # expand over W per tile (or split C_out across a grid axis) instead of this
    # W-replicated weight.
    w_flat = jnp.repeat(w_tc[:, :, :, None], W, axis=3).reshape(
        C_out, KK * CW).astype(jnp.bfloat16)

    flops = int(2 * N * P * KK * CW * (H + C_out))
    bytes_accessed = int(4 * N * 2 * KK * P + 2 * N * CW * H
                         + 2 * C_out * KK * CW + 4 * N * C_out * P)

    y, stats = pl.pallas_call(
        make_deform_kernel(H, W, K, C_in, C_out, PT),
        out_shape=(jax.ShapeDtypeStruct((N, C_out, P), jnp.float32),
                   jax.ShapeDtypeStruct((N, C_out, 2), jnp.float32)),
        grid=(N, n_pt),
        in_specs=[
            pl.BlockSpec((1, 2 * KK, PT), lambda b, j: (b, 0, j)),
            pl.BlockSpec((1, CW, H), lambda b, j: (b, 0, 0)),      # resident per batch
            pl.BlockSpec((C_out, KK * CW), lambda b, j: (0, 0)),   # resident weights
        ],
        out_specs=(
            pl.BlockSpec((1, C_out, PT), lambda b, j: (b, 0, j)),
            pl.BlockSpec((1, C_out, 2), lambda b, j: (b, 0, 0)),   # per-batch accumulator
        ),
        compiler_params=pltpu.CompilerParams(
            dimension_semantics=("parallel", "arbitrary"),
            vmem_limit_bytes=VMEM_LIMIT),
        cost_estimate=pl.CostEstimate(flops=flops, transcendentals=0,
                                      bytes_accessed=bytes_accessed),
    )(coords, xh, w_flat)

    # ---- 3) BatchNorm finalize (tiny per-channel math) + tiled normalize/ReLU ----
    # TODO(synk): BatchNorm running-stats update is a training side effect, not part
    # of the returned forward value, so it is omitted here.
    cnt = float(N * P)
    mean = jnp.sum(stats[:, :, 0], axis=0) / cnt
    var = jnp.maximum(jnp.sum(stats[:, :, 1], axis=0) / cnt - mean * mean, 0.0)
    scale = gamma * lax.rsqrt(var + eps)
    shift = beta - mean * scale

    z = pl.pallas_call(
        bn_relu_kernel,
        out_shape=jax.ShapeDtypeStruct((N, C_out, P), jnp.float32),
        grid=(N, n_pt),
        in_specs=[
            pl.BlockSpec((1, C_out, PT), lambda b, j: (b, 0, j)),
            pl.BlockSpec((C_out, 1), lambda b, j: (0, 0)),
            pl.BlockSpec((C_out, 1), lambda b, j: (0, 0)),
        ],
        out_specs=pl.BlockSpec((1, C_out, PT), lambda b, j: (b, 0, j)),
        compiler_params=pltpu.CompilerParams(
            dimension_semantics=("parallel", "parallel"),
            vmem_limit_bytes=VMEM_LIMIT),
    )(y, scale.reshape(C_out, 1), shift.reshape(C_out, 1))

    return z.reshape(N, C_out, H, W)          # NCHW (free reshape)


# ----------------------------- main -----------------------------------------

if __name__ == "__main__":
    key = jax.random.PRNGKey(0)
    N, C_in, H, W = 2, 4, 16, 16
    C_out, K, pad = 8, 3, 1

    k1, k2, k3, k4 = jax.random.split(key, 4)
    x = jax.random.normal(k1, (N, C_in, H, W), jnp.float32)
    # deterministic synthetic parameters (shapes follow the module's __init__)
    w_off = jax.random.normal(k2, (2 * K * K, C_in, K, K), jnp.float32) * 0.05
    b_off = jax.random.normal(k3, (2 * K * K,), jnp.float32) * 0.05
    w_def = jax.random.normal(k4, (C_out, C_in, K, K), jnp.float32) * 0.1
    gamma = jnp.ones((C_out,), jnp.float32)   # BatchNorm weight init
    beta = jnp.zeros((C_out,), jnp.float32)   # BatchNorm bias init

    out = deform_conv_layer(x, w_off, b_off, w_def, gamma, beta, K=K, pad=pad)
    out = jax.block_until_ready(out)
    assert out.shape == (N, C_out, H, W)
    assert bool(jnp.all(jnp.isfinite(out)))
    print("KERNEL_OK")
</pallas_src>

<mosaic_0001>
module attributes {stable_mosaic.version = 11 : i64} {
  func.func @offset_coords_kernel(%arg0: i32, %arg1: i32, %arg2: memref<1x36x128xbf16, #tpu.memory_space<vmem>>, %arg3: memref<18x36xbf16, #tpu.memory_space<vmem>>, %arg4: memref<18x1xf32, #tpu.memory_space<vmem>>, %arg5: memref<18x128xf32, #tpu.memory_space<vmem>>, %arg6: memref<1x18x128xf32, #tpu.memory_space<vmem>>) attributes {dimension_semantics = [#tpu.dimension_semantics<parallel>, #tpu.dimension_semantics<parallel>], iteration_bounds = array<i64: 2, 2>, scalar_prefetch = 0 : i64, scratch_operands = 0 : i64, tpu.core_type = #tpu.core_type<tc>, window_params = [{transform_indices = @transform_0, window_bounds = array<i64: 1, 36, 128>}, {pipeline_mode = #tpu.pipeline_mode<synchronous>, transform_indices = @transform_1, window_bounds = array<i64: 18, 36>}, {pipeline_mode = #tpu.pipeline_mode<synchronous>, transform_indices = @transform_2, window_bounds = array<i64: 18, 1>}, {transform_indices = @transform_3, window_bounds = array<i64: 18, 128>}, {transform_indices = @transform_4, window_bounds = array<i64: 1, 18, 128>}]} {
    %c0 = arith.constant 0 : index
    %c0_0 = arith.constant 0 : index
    %0 = vector.load %arg3[%c0, %c0_0] : memref<18x36xbf16, #tpu.memory_space<vmem>>, vector<18x36xbf16>
    %c0_1 = arith.constant 0 : index
    %c0_2 = arith.constant 0 : index
    %c0_3 = arith.constant 0 : index
    %1 = vector.load %arg2[%c0_1, %c0_2, %c0_3] : memref<1x36x128xbf16, #tpu.memory_space<vmem>>, vector<1x36x128xbf16>
    %2 = vector.shape_cast %1 : vector<1x36x128xbf16> to vector<36x128xbf16>
    %cst = arith.constant dense<0.000000e+00> : vector<18x128xf32>
    %3 = tpu.matmul %0, %2, %cst {dimension_numbers = #tpu.dot_dimension_numbers<[1], [0], [0], [1], [0, 0, 1, 1], [], []>} : vector<18x36xbf16>, vector<36x128xbf16>, vector<18x128xf32> -> vector<18x128xf32>
    %c0_4 = arith.constant 0 : index
    %c0_5 = arith.constant 0 : index
    %4 = vector.load %arg4[%c0_4, %c0_5] : memref<18x1xf32, #tpu.memory_space<vmem>>, vector<18x1xf32>
    %5 = vector.broadcast %4 : vector<18x1xf32> to vector<18x128xf32>
    %6 = arith.addf %3, %5 : vector<18x128xf32>
    %c0_6 = arith.constant 0 : index
    %c0_7 = arith.constant 0 : index
    %7 = vector.load %arg5[%c0_6, %c0_7] : memref<18x128xf32, #tpu.memory_space<vmem>>, vector<18x128xf32>
    %8 = arith.addf %6, %7 : vector<18x128xf32>
    %c0_8 = arith.constant 0 : index
    %c0_9 = arith.constant 0 : index
    %c0_10 = arith.constant 0 : index
    %9 = vector.load %arg6[%c0_8, %c0_9, %c0_10] : memref<1x18x128xf32, #tpu.memory_space<vmem>>, vector<1x18x128xf32>
    %10 = vector.shape_cast %9 : vector<1x18x128xf32> to vector<18x128xf32>
    %11 = vector.shape_cast %8 : vector<18x128xf32> to vector<1x18x128xf32>
    tpu.vector_store %arg6[%c0_8, %c0_9, %c0_10], %11 {strides = array<i32>} : memref<1x18x128xf32, #tpu.memory_space<vmem>>, vector<1x18x128xf32>,
    return
  }
  func.func @transform_0(%arg0: i32, %arg1: i32) -> (i32, i32, i32) {
    %c0_i32 = arith.constant 0 : i32
    %c0_i32_0 = arith.constant 0 : i32
    return %arg0, %c0_i32, %arg1 : i32, i32, i32
  }
  func.func @transform_1(%arg0: i32, %arg1: i32) -> (i32, i32) {
    %c0_i32 = arith.constant 0 : i32
    %c0_i32_0 = arith.constant 0 : i32
    %c0_i32_1 = arith.constant 0 : i32
    return %c0_i32, %c0_i32_0 : i32, i32
  }
  func.func @transform_2(%arg0: i32, %arg1: i32) -> (i32, i32) {
    %c0_i32 = arith.constant 0 : i32
    %c0_i32_0 = arith.constant 0 : i32
    %c0_i32_1 = arith.constant 0 : i32
    return %c0_i32, %c0_i32_0 : i32, i32
  }
  func.func @transform_3(%arg0: i32, %arg1: i32) -> (i32, i32) {
    %c0_i32 = arith.constant 0 : i32
    %c0_i32_0 = arith.constant 0 : i32
    return %c0_i32, %arg1 : i32, i32
  }
  func.func @transform_4(%arg0: i32, %arg1: i32) -> (i32, i32, i32) {
    %c0_i32 = arith.constant 0 : i32
    %c0_i32_0 = arith.constant 0 : i32
    return %arg0, %c0_i32, %arg1 : i32, i32, i32
  }
}

</mosaic_0001>

<llo_original>
// kernel: tpu_custom_call.1
$region0: #{tpu_custom_call.1}
  #allocation0 [shape = 'u32[]', space=smem, size = 0x4, offset = 0x4, fixed_abs, tag = 'smem constant byte address 0x4 - core index']
  #allocation1 [shape = 'u32[144,128]{1,0:T(1,128)}', space=vmem, size = 0x12000, scoped, tag = 'internal scratch']
  %s0 = inlined_call_operand.vmem [shape: bf16[2,36,256], index: 0, kind: input, shape index: {}]
  %s1 = inlined_call_operand.vmem [shape: bf16[18,36], index: 1, kind: input, shape index: {}]
  %s2 = inlined_call_operand.vmem [shape: f32[18,1], index: 2, kind: input, shape index: {}]
  %s3 = inlined_call_operand.vmem [shape: f32[18,256], index: 3, kind: input, shape index: {}]
  %s4 = inlined_call_operand.vmem [shape: f32[2,18,256], index: 4, kind: output, shape index: {}]
  %s5 = sld [smem:[#allocation0]]
  $region162: #{tpu_custom_call.1} parent=0
    _
  %s7 = ssub.s32 1, %s5
  %s8 = scalar_select 0, %s7, %s5
  $region1: #{tpu_custom_call.1} parent=0
    #allocation2 [shape = 'u8[20480]{0}', space=vmem, size = 0x5000, scoped, tag = 'input window, operand 0']
    #allocation3 [shape = 'u8[24576]{0}', space=vmem, size = 0x6000, scoped, tag = 'input window, operand 3']
    #allocation4 [shape = 'u8[24576]{0}', space=vmem, size = 0x6000, scoped, tag = 'output window, operand 0']
    loop: start=0, step=1, limit=6
    $region2: #{tpu_custom_call.1} parent=1 // loop_pre_header
      _
    $region3: #{tpu_custom_call.1} parent=1 // loop_header
      %s10 = sphi 0, %s14
      %p11 = scmp.ge.s32.totalorder %s10, 6
      %s17 = sphi 0, %s29
      %s18 = sphi 0, %s25
      %s19 = sphi 0, %s17
      %s20 = sphi 0, %s18
      %s21 = sphi 0, %s19
      %s22 = sphi 0, %s20
      %s34 = sphi 0, %s36
      %s37 = sphi 0, %s34
      %s38 = sphi 0, %s37
      %s54 = sphi 0, %s38
      %s58 = sphi 0, %s58
      %s60 = sphi 0, %s58
      %s61 = sphi 0, %s60
      %s75 = sphi 0, %s61
      %s79 = sphi 0, %s79
      %s81 = sphi 0, %s79
      %s82 = sphi 0, %s81
      %s96 = sphi 0, %s82
      %s102 = sphi 0, %s104
      %s105 = sphi 0, %s102
      %s106 = sphi 0, %s105
      %s122 = sphi 0, %s106
      %s130 = sphi 0, %s132
      %s133 = sphi 0, %s130
      %s134 = sphi 0, %s133
      %s150 = sphi 0, %s134
    $region4: #{tpu_custom_call.1} parent=1 // loop_header_branch
      %13 = sbr.rel (%p11) target = $region8
    $region5: #{tpu_custom_call.1} parent=1 // loop_body
      %s15 = ssub.s32 %s10, 1
      %s16 = ssub.s32 %s10, 2
      %s23 = sadd.s32 1, %s18
      %p24 = scmp.ge.s32.totalorder %s23, 2
      %s25 = scalar_select %p24, 0, %s23
      %s26 = sadd.s32 1, %s17
      %s27 = scalar_select %p24, %s26, %s17
      %p28 = scmp.ge.s32.totalorder %s27, 2
      %s29 = scalar_select %p28, 0, %s27
      %s30 = ssub.s32 %s17, %s29
      %s31 = ssub.s32 %s18, %s25
      %s32 = sor.u32 %s30, %s31
      %p33 = scmp.eq.s32.totalorder %s32, 0
      %s35 = sadd.s32 %s34, 1
      %s36 = scalar_select %p33, %s34, %s35
      %p39 = pneg %p33
      %p40 = scmp.eq.s32.totalorder %s10, 3
      %p41 = por %p39, %p40
      %p42 = scmp.ne.s32.totalorder %s34, %s37
      %p43 = scmp.eq.s32.totalorder %s10, 0
      %p44 = por %p42, %p43
      %p45 = scmp.ne.s32.totalorder %s34, %s37
      %p46 = scmp.eq.s32.totalorder %s15, 3
      %p47 = por %p45, %p46
      %p48 = scmp.ne.s32.totalorder %s37, %s38
      %p49 = scmp.eq.s32.totalorder %s15, 0
      %p50 = por %p48, %p49
      %p51 = scmp.ne.s32.totalorder %s37, %s38
      %p52 = scmp.eq.s32.totalorder %s16, 3
      %p53 = por %p51, %p52
      %p55 = scmp.ne.s32.totalorder %s38, %s54
      %p56 = scmp.eq.s32.totalorder %s16, 0
      %p57 = por %p55, %p56
      %s59 = sadd.s32 %s58, 1
      %p62 = scmp.eq.s32.totalorder %s10, 3
      %p63 = scmp.ne.s32.totalorder %s58, %s60
      %p64 = scmp.eq.s32.totalorder %s10, 0
      %p65 = por %p63, %p64
      %p66 = scmp.ne.s32.totalorder %s58, %s60
      %p67 = scmp.eq.s32.totalorder %s15, 3
      %p68 = por %p66, %p67
      %p69 = scmp.ne.s32.totalorder %s60, %s61
      %p70 = scmp.eq.s32.totalorder %s15, 0
      %p71 = por %p69, %p70
      %p72 = scmp.ne.s32.totalorder %s60, %s61
      %p73 = scmp.eq.s32.totalorder %s16, 3
      %p74 = por %p72, %p73
      %p76 = scmp.ne.s32.totalorder %s61, %s75
      %p77 = scmp.eq.s32.totalorder %s16, 0
      %p78 = por %p76, %p77
      %s80 = sadd.s32 %s79, 1
      %p83 = scmp.eq.s32.totalorder %s10, 3
      %p84 = scmp.ne.s32.totalorder %s79, %s81
      %p85 = scmp.eq.s32.totalorder %s10, 0
      %p86 = por %p84, %p85
      %p87 = scmp.ne.s32.totalorder %s79, %s81
      %p88 = scmp.eq.s32.totalorder %s15, 3
      %p89 = por %p87, %p88
      %p90 = scmp.ne.s32.totalorder %s81, %s82
      %p91 = scmp.eq.s32.totalorder %s15, 0
      %p92 = por %p90, %p91
      %p93 = scmp.ne.s32.totalorder %s81, %s82
      %p94 = scmp.eq.s32.totalorder %s16, 3
      %p95 = por %p93, %p94
      %p97 = scmp.ne.s32.totalorder %s82, %s96
      %p98 = scmp.eq.s32.totalorder %s16, 0
      %p99 = por %p97, %p98
      %s100 = ssub.s32 %s18, %s25
      %p101 = scmp.eq.s32.totalorder %s100, 0
      %s103 = sadd.s32 %s102, 1
      %s104 = scalar_select %p101, %s102, %s103
      %p107 = pneg %p101
      %p108 = scmp.eq.s32.totalorder %s10, 3
      %p109 = por %p107, %p108
      %p110 = scmp.ne.s32.totalorder %s102, %s105
      %p111 = scmp.eq.s32.totalorder %s10, 0
      %p112 = por %p110, %p111
      %p113 = scmp.ne.s32.totalorder %s102, %s105
      %p114 = scmp.eq.s32.totalorder %s15, 3
      %p115 = por %p113, %p114
      %p116 = scmp.ne.s32.totalorder %s105, %s106
      %p117 = scmp.eq.s32.totalorder %s15, 0
      %p118 = por %p116, %p117
      %p119 = scmp.ne.s32.totalorder %s105, %s106
      %p120 = scmp.eq.s32.totalorder %s16, 3
      %p121 = por %p119, %p120
      %p123 = scmp.ne.s32.totalorder %s106, %s122
      %p124 = scmp.eq.s32.totalorder %s16, 0
      %p125 = por %p123, %p124
      %s126 = ssub.s32 %s17, %s29
      %s127 = ssub.s32 %s18, %s25
      %s128 = sor.u32 %s126, %s127
      %p129 = scmp.eq.s32.totalorder %s128, 0
      %s131 = sadd.s32 %s130, 1
      %s132 = scalar_select %p129, %s130, %s131
      %p135 = pneg %p129
      %p136 = scmp.eq.s32.totalorder %s10, 3
      %p137 = por %p135, %p136
      %p138 = scmp.ne.s32.totalorder %s130, %s133
      %p139 = scmp.eq.s32.totalorder %s10, 0
      %p140 = por %p138, %p139
      %p141 = scmp.ne.s32.totalorder %s130, %s133
      %p142 = scmp.eq.s32.totalorder %s15, 3
      %p143 = por %p141, %p142
      %p144 = scmp.ne.s32.totalorder %s133, %s134
      %p145 = scmp.eq.s32.totalorder %s15, 0
      %p146 = por %p144, %p145
      %p147 = scmp.ne.s32.totalorder %s133, %s134
      %p148 = scmp.eq.s32.totalorder %s16, 3
      %p149 = por %p147, %p148
      %p151 = scmp.ne.s32.totalorder %s134, %s150
      %p152 = scmp.eq.s32.totalorder %s16, 0
      %p153 = por %p151, %p152
      %p154 = scmp.le.s32.totalorder 1, %s10
      %p155 = scmp.lt.s32.totalorder %s10, 5
      %p156 = pnand %p154, %p155
      %p157 = pneg %p156
      // Predicated region
      $region9: #{tpu_custom_call.1} parent=5 // pred_check
        _
      $region10: #{tpu_custom_call.1} parent=5 // pred_check_branch
        %159 = sbr.rel (%p156) target = $region12
      $region11: #{tpu_custom_call.1} parent=5 // pred_region
        %s160 = ssub.s32 %s10, 1
        // Predicated region
        $region13: #{tpu_custom_call.1} parent=11 // pred_check
          %p161 = pneg %p71
        $region14: #{tpu_custom_call.1} parent=11 // pred_check_branch
          %163 = sbr.rel (%p161) target = $region16
        $region15: #{tpu_custom_call.1} parent=11 // pred_region
          _
        $region16: #{tpu_custom_call.1} parent=11 // pred_fallthru
          _
        // Predicated region
        $region17: #{tpu_custom_call.1} parent=11 // pred_check
          %p164 = pneg %p92
        $region18: #{tpu_custom_call.1} parent=11 // pred_check_branch
          %166 = sbr.rel (%p164) target = $region20
        $region19: #{tpu_custom_call.1} parent=11 // pred_region
          _
        $region20: #{tpu_custom_call.1} parent=11 // pred_fallthru
          _
      $region12: #{tpu_custom_call.1} parent=5 // pred_fallthru
        _
      %p167 = scmp.lt.s32.totalorder %s10, 4
      // Predicated region
      $region21: #{tpu_custom_call.1} parent=5 // pred_check
        %p168 = pneg %p167
      $region22: #{tpu_custom_call.1} parent=5 // pred_check_branch
        %170 = sbr.rel (%p168) target = $region24
      $region23: #{tpu_custom_call.1} parent=5 // pred_region
        // Predicated region
        $region25: #{tpu_custom_call.1} parent=23 // pred_check
          %p171 = pneg %p44
        $region26: #{tpu_custom_call.1} parent=23 // pred_check_branch
          %173 = sbr.rel (%p171) target = $region28
        $region27: #{tpu_custom_call.1} parent=23 // pred_region
          %s174 = sand.u32 %s34, 1
          %s175 = sand.u32 %s34, 1
          %s176 = smul.addr %s175, 20
          %s177 = scalar_lea.vmem [#allocation2], %s176
          %s178 = smul.addr %s17, 10
          %s179 = sadd.s32 %s18, %s178
          %s180 = smul.addr %s179, 4
          %s181 = scalar_lea.vmem %s0, %s180
          // Predicated region
          $region29: #{tpu_custom_call.1} parent=27 // pred_check
            _
          $region30: #{tpu_custom_call.1} parent=27 // pred_check_branch
            %183 = sbr.rel (0) target = $region32
          $region31: #{tpu_custom_call.1} parent=27 // pred_region
            // Predicated region
            $region33: #{tpu_custom_call.1} parent=31 // pred_check
              _
            $region34: #{tpu_custom_call.1} parent=31 // pred_check_branch
              %185 = sbr.rel target = $region36
            $region35: #{tpu_custom_call.1} parent=31 // pred_region
              // Predicated region
              $region48: #{tpu_custom_call.1} parent=35 // pred_check
                _
              $region49: #{tpu_custom_call.1} parent=35 // pred_check_branch
                %209 = sbr.rel (0) target = $region51
              $region50: #{tpu_custom_call.1} parent=35 // pred_region
                loop: start=0, step=1, limit=1
                $region52: #{tpu_custom_call.1} parent=50 // loop_pre_header
                  _
                $region53: #{tpu_custom_call.1} parent=50 // loop_header
                  %s211 = sphi 0, %s215
                  %p212 = scmp.ge.s32.totalorder %s211, 1
                  %s216 = sphi %s181, %s181
                  %s217 = sphi %s177, %s177
                $region54: #{tpu_custom_call.1} parent=50 // loop_header_branch
                  %214 = sbr.rel (%p212) target = $region58
                $region55: #{tpu_custom_call.1} parent=50 // loop_body
                  _
                $region56: #{tpu_custom_call.1} parent=50 // loop_footer
                  %s215 = sadd.s32 1, %s211
                $region57: #{tpu_custom_call.1} parent=50 // loop_footer_branch
                  %210 = sbr.rel target = $region53
                $region58: #{tpu_custom_call.1} parent=50 // loop_exit
                  _
                %s219 = ssub.s32 16, 1
                loop: start=0, step=1, limit=1
                $region59: #{tpu_custom_call.1} parent=50 // loop_pre_header
                  _
                $region60: #{tpu_custom_call.1} parent=50 // loop_header
                  %s221 = sphi 0, %s225
                  %p222 = scmp.ge.s32.totalorder %s221, 1
                  %s226 = sphi %s181, %s181
                  %s227 = sphi %s177, %s177
                $region61: #{tpu_custom_call.1} parent=50 // loop_header_branch
                  %224 = sbr.rel (%p222) target = $region65
                $region62: #{tpu_custom_call.1} parent=50 // loop_body
                  %v228 = vld [vmem:[%s226] sm:%s219]
                  %229 = vst [vmem:[%s227] sm:%s219] %v228
                  %v230 = vld [vmem:[%s226 + $0x8] sm:%s219]
                  %231 = vst [vmem:[%s227 + $0x4] sm:%s219] %v230
                  %v232 = vld [vmem:[%s226 + $0x10] sm:%s219]
                  %233 = vst [vmem:[%s227 + $0x8] sm:%s219] %v232
                  %v234 = vld [vmem:[%s226 + $0x18] sm:%s219]
                  %235 = vst [vmem:[%s227 + $0xc] sm:%s219] %v234
                  %v236 = vld [vmem:[%s226 + $0x20] sm:%s219]
                  %237 = vst [vmem:[%s227 + $0x10] sm:%s219] %v236
                $region63: #{tpu_custom_call.1} parent=50 // loop_footer
                  %s225 = sadd.s32 1, %s221
                $region64: #{tpu_custom_call.1} parent=50 // loop_footer_branch
                  %220 = sbr.rel target = $region60
                $region65: #{tpu_custom_call.1} parent=50 // loop_exit
                  _
              $region51: #{tpu_custom_call.1} parent=35 // pred_fallthru
                _
            $region36: #{tpu_custom_call.1} parent=31 // pred_fallthru
              _
            // Predicated region
            $region37: #{tpu_custom_call.1} parent=31 // pred_check
              _
            $region38: #{tpu_custom_call.1} parent=31 // pred_check_branch
              %187 = sbr.rel (0) target = $region40
            $region39: #{tpu_custom_call.1} parent=31 // pred_region
              %s189 = ssub.s32 16, 1
              loop: start=0, step=1, limit=1
              $region41: #{tpu_custom_call.1} parent=39 // loop_pre_header
                _
              $region42: #{tpu_custom_call.1} parent=39 // loop_header
                %s191 = sphi 0, %s195
                %p192 = scmp.ge.s32.totalorder %s191, 1
                %s196 = sphi %s181, %s181
                %s197 = sphi %s177, %s177
              $region43: #{tpu_custom_call.1} parent=39 // loop_header_branch
                %194 = sbr.rel (%p192) target = $region47
              $region44: #{tpu_custom_call.1} parent=39 // loop_body
                %v198 = vld [vmem:[%s196] sm:%s189]
                %199 = vst [vmem:[%s197] sm:%s189] %v198
                %v200 = vld [vmem:[%s196 + $0x8] sm:%s189]
                %201 = vst [vmem:[%s197 + $0x4] sm:%s189] %v200
                %v202 = vld [vmem:[%s196 + $0x10] sm:%s189]
                %203 = vst [vmem:[%s197 + $0x8] sm:%s189] %v202
                %v204 = vld [vmem:[%s196 + $0x18] sm:%s189]
                %205 = vst [vmem:[%s197 + $0xc] sm:%s189] %v204
                %v206 = vld [vmem:[%s196 + $0x20] sm:%s189]
                %207 = vst [vmem:[%s197 + $0x10] sm:%s189] %v206
              $region45: #{tpu_custom_call.1} parent=39 // loop_footer
                %s195 = sadd.s32 1, %s191
              $region46: #{tpu_custom_call.1} parent=39 // loop_footer_branch
                %190 = sbr.rel target = $region42
              $region47: #{tpu_custom_call.1} parent=39 // loop_exit
                _
            $region40: #{tpu_custom_call.1} parent=31 // pred_fallthru
              _
          $region32: #{tpu_custom_call.1} parent=27 // pred_fallthru
            _
          %238 = vnop
        $region28: #{tpu_custom_call.1} parent=23 // pred_fallthru
          _
        // Predicated region
        $region66: #{tpu_custom_call.1} parent=23 // pred_check
          %p239 = pneg %p112
        $region67: #{tpu_custom_call.1} parent=23 // pred_check_branch
          %241 = sbr.rel (%p239) target = $region69
        $region68: #{tpu_custom_call.1} parent=23 // pred_region
          %s242 = sand.u32 %s102, 1
          %s243 = sand.u32 %s102, 1
          %s244 = smul.addr %s243, 24
          %s245 = scalar_lea.vmem [#allocation3], %s244
          %s246 = smul.addr %s18, 8
          %s247 = scalar_lea.vmem %s3, %s246
          // Predicated region
          $region70: #{tpu_custom_call.1} parent=68 // pred_check
            _
          $region71: #{tpu_custom_call.1} parent=68 // pred_check_branch
            %249 = sbr.rel (0) target = $region73
          $region72: #{tpu_custom_call.1} parent=68 // pred_region
            // Predicated region
            $region74: #{tpu_custom_call.1} parent=72 // pred_check
              _
            $region75: #{tpu_custom_call.1} parent=72 // pred_check_branch
              %251 = sbr.rel (0) target = $region77
            $region76: #{tpu_custom_call.1} parent=72 // pred_region
              // Predicated region
              $region89: #{tpu_custom_call.1} parent=76 // pred_check
                _
              $region90: #{tpu_custom_call.1} parent=76 // pred_check_branch
                %271 = sbr.rel (0) target = $region92
              $region91: #{tpu_custom_call.1} parent=76 // pred_region
                loop: start=0, step=1, limit=1
                $region93: #{tpu_custom_call.1} parent=91 // loop_pre_header
                  _
                $region94: #{tpu_custom_call.1} parent=91 // loop_header
                  %s273 = sphi 0, %s277
                  %p274 = scmp.ge.s32.totalorder %s273, 1
                  %s278 = sphi %s247, %s247
                  %s279 = sphi %s245, %s245
                $region95: #{tpu_custom_call.1} parent=91 // loop_header_branch
                  %276 = sbr.rel (%p274) target = $region99
                $region96: #{tpu_custom_call.1} parent=91 // loop_body
                  %v280 = vld [vmem:[%s278] sm:$0xff]
                  %281 = vst [vmem:[%s279] sm:$0xff] %v280
                  %v282 = vld [vmem:[%s278 + $0x10] sm:$0xff]
                  %283 = vst [vmem:[%s279 + $0x8] sm:$0xff] %v282
                  %v284 = vld [vmem:[%s278 + $0x20] sm:$0xff]
                  %285 = vst [vmem:[%s279 + $0x10] sm:$0xff] %v284
                $region97: #{tpu_custom_call.1} parent=91 // loop_footer
                  %s277 = sadd.s32 1, %s273
                $region98: #{tpu_custom_call.1} parent=91 // loop_footer_branch
                  %272 = sbr.rel target = $region94
                $region99: #{tpu_custom_call.1} parent=91 // loop_exit
                  _
              $region92: #{tpu_custom_call.1} parent=76 // pred_fallthru
                _
              // Predicated region
              $region100: #{tpu_custom_call.1} parent=76 // pred_check
                _
              $region101: #{tpu_custom_call.1} parent=76 // pred_check_branch
                %287 = sbr.rel target = $region103
              $region102: #{tpu_custom_call.1} parent=76 // pred_region
                _
              $region103: #{tpu_custom_call.1} parent=76 // pred_fallthru
                _
            $region77: #{tpu_custom_call.1} parent=72 // pred_fallthru
              _
            // Predicated region
            $region78: #{tpu_custom_call.1} parent=72 // pred_check
              _
            $region79: #{tpu_custom_call.1} parent=72 // pred_check_branch
              %253 = sbr.rel target = $region81
            $region80: #{tpu_custom_call.1} parent=72 // pred_region
              %s255 = ssub.s32 256, 1
              loop: start=0, step=1, limit=1
              $region82: #{tpu_custom_call.1} parent=80 // loop_pre_header
                _
              $region83: #{tpu_custom_call.1} parent=80 // loop_header
                %s257 = sphi 0, %s261
                %p258 = scmp.ge.s32.totalorder %s257, 1
                %s262 = sphi %s247, %s247
                %s263 = sphi %s245, %s245
              $region84: #{tpu_custom_call.1} parent=80 // loop_header_branch
                %260 = sbr.rel (%p258) target = $region88
              $region85: #{tpu_custom_call.1} parent=80 // loop_body
                %v264 = vld [vmem:[%s262] sm:%s255]
                %265 = vst [vmem:[%s263] sm:%s255] %v264
                %v266 = vld [vmem:[%s262 + $0x10] sm:%s255]
                %267 = vst [vmem:[%s263 + $0x8] sm:%s255] %v266
                %v268 = vld [vmem:[%s262 + $0x20] sm:%s255]
                %269 = vst [vmem:[%s263 + $0x10] sm:%s255] %v268
              $region86: #{tpu_custom_call.1} parent=80 // loop_footer
                %s261 = sadd.s32 1, %s257
              $region87: #{tpu_custom_call.1} parent=80 // loop_footer_branch
                %256 = sbr.rel target = $region83
              $region88: #{tpu_custom_call.1} parent=80 // loop_exit
                _
            $region81: #{tpu_custom_call.1} parent=72 // pred_fallthru
              _
          $region73: #{tpu_custom_call.1} parent=68 // pred_fallthru
            _
          %288 = vnop
        $region69: #{tpu_custom_call.1} parent=23 // pred_fallthru
          _
      $region24: #{tpu_custom_call.1} parent=5 // pred_fallthru
        _
      %p289 = scmp.le.s32.totalorder 1, %s10
      %p290 = scmp.lt.s32.totalorder %s10, 5
      %p291 = pnand %p289, %p290
      %p292 = pneg %p291
      // Predicated region
      $region104: #{tpu_custom_call.1} parent=5 // pred_check
        _
      $region105: #{tpu_custom_call.1} parent=5 // pred_check_branch
        %294 = sbr.rel (%p291) target = $region107
      $region106: #{tpu_custom_call.1} parent=5 // pred_region
        %s295 = ssub.s32 %s10, 1
        %s296 = sand.u32 %s37, 1
        %s297 = sand.u32 %s37, 1
        %s298 = smul.addr %s297, 20
        %s299 = scalar_lea.vmem [#allocation2], %s298
        // Predicated region
        $region108: #{tpu_custom_call.1} parent=106 // pred_check
          %p300 = pneg %p50
        $region109: #{tpu_custom_call.1} parent=106 // pred_check_branch
          %302 = sbr.rel (%p300) target = $region111
        $region110: #{tpu_custom_call.1} parent=106 // pred_region
          _
        $region111: #{tpu_custom_call.1} parent=106 // pred_fallthru
          _
        %s303 = sand.u32 %s105, 1
        %s304 = sand.u32 %s105, 1
        %s305 = smul.addr %s304, 24
        %s306 = scalar_lea.vmem [#allocation3], %s305
        // Predicated region
        $region112: #{tpu_custom_call.1} parent=106 // pred_check
          %p307 = pneg %p118
        $region113: #{tpu_custom_call.1} parent=106 // pred_check_branch
          %309 = sbr.rel (%p307) target = $region115
        $region114: #{tpu_custom_call.1} parent=106 // pred_region
          _
        $region115: #{tpu_custom_call.1} parent=106 // pred_fallthru
          _
        %s310 = sand.u32 %s37, 1
        %s311 = sand.u32 %s37, 1
        %s312 = smul.addr %s311, 20
        %s313 = scalar_lea.vmem [#allocation2], %s312
        %p314 = pneg %p50
        %p315 = pneg %p47
        %p316 = pneg %p71
        %p317 = pneg %p68
        %p318 = pneg %p92
        %p319 = pneg %p89
        %s320 = sand.u32 %s105, 1
        %s321 = sand.u32 %s105, 1
        %s322 = smul.addr %s321, 24
        %s323 = scalar_lea.vmem [#allocation3], %s322
        %p324 = pneg %p118
        %p325 = pneg %p115
        %p326 = pneg %p146
        %p327 = pneg %p143
        %s328 = sand.u32 %s133, 1
        %s329 = sand.u32 %s133, 1
        %s330 = smul.addr %s329, 24
        %s331 = scalar_lea.vmem [#allocation4], %s330
        %v333 = vld [vmem:[%s1] sm:$0xf]
        %v334 = vld [vmem:[%s1 + $0x4] sm:$0xf]
        %v335 = vld [vmem:[%s1 + $0x8] sm:$0x1]
        %v336 = vld [vmem:[%s299] sm:$0xf]
        %v337 = vld [vmem:[%s299 + $0x4] sm:$0xf]
        %v338 = vld [vmem:[%s299 + $0x8] sm:$0xf]
        %v339 = vld [vmem:[%s299 + $0xc] sm:$0xf]
        %v340 = vld [vmem:[%s299 + $0x10] sm:$0x3]
        %v341 = vld [vmem:[%s2] sm:$0xff]
        %v342 = vld [vmem:[%s2 + $0x8] sm:$0xff]
        %v343 = vld [vmem:[%s2 + $0x10] sm:$0x3]
        %345 = vset.pattern.permute.xlu0 0
        %346 = vperm.xlu0 %345, %v341
        %v347 = vpop.permute.xlu0 %346
        %350 = vset.pattern.permute.xlu0 0
        %351 = vperm.xlu0 %350, %v342
        %v352 = vpop.permute.xlu0 %351
        %355 = vset.pattern.permute.xlu0 0
        %356 = vperm.xlu0 %355, %v343
        %v357 = vpop.permute.xlu0 %356
        %v362 = vunpack.c.l.b16 %v333
        %v363 = vunpack.c.l.b16 %v334
        %v364 = vunpack.c.l.b16 %v335
        %v365 = vpack.c.b16 %v363, %v362
        %v366 = vpack.c.b16 %v364, %v364
        %v372 = vunpack.c.l.b16 %v336
        %v373 = vunpack.c.l.b16 %v337
        %v374 = vunpack.c.l.b16 %v338
        %v375 = vunpack.c.l.b16 %v339
        %v376 = vunpack.c.l.b16 %v340
        %v377 = vpack.c.b16 %v373, %v372
        %v378 = vpack.c.b16 %v375, %v374
        %v379 = vpack.c.b16 %v376, %v376
        %vm382 = vcmask 293888
        %v384 = vsel %vm382, %v365, 0
        %v387 = vsel %vm382, %v366, 0
        %vm389 = vcmask 1041408
        %v391 = vsel %vm389, %v379, 0
        %393 = vmatprep.subr.bf16.mxu0 0
        %394 = vmatpush1.bf16.msra.mxu0 0
        %395 = vmatprep.subr.bf16.mxu0 0
        %396 = vmatpush1.bf16.msra.mxu0 0
        %397 = vmatprep.subr.bf16.mxu0 0
        %398 = vmatpush1.bf16.msra.mxu0 0
        %399 = vmatprep.subr.bf16.mxu0 0
        %400 = vmatpush1.bf16.msra.mxu0 0
        %401 = vmatprep.subr.bf16.mxu0 0
        %402 = vmatpush1.bf16.msra.mxu0 0
        %403 = vmatprep.subr.bf16.mxu0 0
        %404 = vmatpush1.bf16.msra.mxu0 %v391
        %405 = vmatprep.subr.bf16.mxu0 0
        %406 = vmatpush1.bf16.msra.mxu0 %v378
        %407 = vmatprep.subr.bf16.mxu0 0
        %408 = vmatpush1.bf16.msra.mxu0 %v377
        %409 = vmatprep.subr.bf16.mxu0 0
        %410 = vmatpush2.bf16.msra.mxu0 0
        %411 = vmatprep.subr.bf16.mxu0 0
        %412 = vmatpush2.bf16.msra.mxu0 0
        %413 = vmatprep.subr.bf16.mxu0 0
        %414 = vmatpush2.bf16.msra.mxu0 0
        %415 = vmatprep.subr.bf16.mxu0 0
        %416 = vmatpush2.bf16.msra.mxu0 0
        %417 = vmatprep.subr.bf16.mxu0 0
        %418 = vmatpush2.bf16.msra.mxu0 0
        %419 = vmatprep.subr.bf16.mxu0 0
        %420 = vmatpush2.bf16.msra.mxu0 0
        %421 = vmatprep.subr.bf16.mxu0 0
        %422 = vmatpush2.bf16.msra.mxu0 0
        %423 = vmatprep.subr.bf16.mxu0 0
        %424 = vmatpush2.bf16.msra.mxu0 0
        %425 = vmatprep.mubr.bf16.mxu0 0
        %426 = vmatmul.mubr.bf16.gmra.mxu0 %v384
        %v427 = vpop.f32.mrf.mxu0
        %v428 = vadd.f32 %v347, %v427
        %v429 = vpop.f32.mrf.mxu0
        %v430 = vpop.f32.mrf.mxu0
        %v431 = vadd.f32 %v352, %v430
        %v432 = vpop.f32.mrf.mxu0
        %433 = vmatprep.mubr.bf16.mxu0 0
        %434 = vmatmul.mubr.bf16.gmra.mxu0 %v387
        %v435 = vpop.f32.mrf.mxu0
        %v436 = vadd.f32 %v357, %v435
        %v437 = vpop.f32.mrf.mxu0
        %v438 = vpop.f32.mrf.mxu0
        %v439 = vpop.f32.mrf.mxu0
        %440 = vdwg.mxu0
        %v441 = vld [vmem:[%s306] sm:$0xff]
        %v442 = vld [vmem:[%s306 + $0x8] sm:$0xff]
        %v443 = vld [vmem:[%s306 + $0x10] sm:$0x3]
        %v444 = vadd.f32 %v428, %v441
        %v445 = vadd.f32 %v431, %v442
        %v446 = vadd.f32 %v436, %v443
        %447 = vst [vmem:[%s331] sm:$0xff] %v444
        %448 = vst [vmem:[%s331 + $0x8] sm:$0xff] %v445
        %449 = vst [vmem:[%s331 + $0x10] sm:$0x3] %v446
        %s450 = sand.u32 %s133, 1
        %s451 = sand.u32 %s133, 1
        %s452 = smul.addr %s451, 24
        %s453 = scalar_lea.vmem [#allocation4], %s452
        // Predicated region
        $region116: #{tpu_custom_call.1} parent=106 // pred_check
          %p454 = pneg %p143
        $region117: #{tpu_custom_call.1} parent=106 // pred_check_branch
          %456 = sbr.rel (%p454) target = $region119
        $region118: #{tpu_custom_call.1} parent=106 // pred_region
          %s457 = smul.addr %s19, 6
          %s458 = sadd.s32 %s20, %s457
          %s459 = smul.addr %s458, 8
          %s460 = scalar_lea.vmem %s4, %s459
          // Predicated region
          $region120: #{tpu_custom_call.1} parent=118 // pred_check
            _
          $region121: #{tpu_custom_call.1} parent=118 // pred_check_branch
            %462 = sbr.rel (0) target = $region123
          $region122: #{tpu_custom_call.1} parent=118 // pred_region
            // Predicated region
            $region124: #{tpu_custom_call.1} parent=122 // pred_check
              _
            $region125: #{tpu_custom_call.1} parent=122 // pred_check_branch
              %464 = sbr.rel (0) target = $region127
            $region126: #{tpu_custom_call.1} parent=122 // pred_region
              // Predicated region
              $region139: #{tpu_custom_call.1} parent=126 // pred_check
                _
              $region140: #{tpu_custom_call.1} parent=126 // pred_check_branch
                %484 = sbr.rel (0) target = $region142
              $region141: #{tpu_custom_call.1} parent=126 // pred_region
                loop: start=0, step=1, limit=1
                $region143: #{tpu_custom_call.1} parent=141 // loop_pre_header
                  _
                $region144: #{tpu_custom_call.1} parent=141 // loop_header
                  %s486 = sphi 0, %s490
                  %p487 = scmp.ge.s32.totalorder %s486, 1
                  %s491 = sphi %s453, %s453
                  %s492 = sphi %s460, %s460
                $region145: #{tpu_custom_call.1} parent=141 // loop_header_branch
                  %489 = sbr.rel (%p487) target = $region149
                $region146: #{tpu_custom_call.1} parent=141 // loop_body
                  %v493 = vld [vmem:[%s491] sm:$0xff]
                  %494 = vst [vmem:[%s492] sm:$0xff] %v493
                  %v495 = vld [vmem:[%s491 + $0x8] sm:$0xff]
                  %496 = vst [vmem:[%s492 + $0x10] sm:$0xff] %v495
                  %v497 = vld [vmem:[%s491 + $0x10] sm:$0xff]
                  %498 = vst [vmem:[%s492 + $0x20] sm:$0xff] %v497
                $region147: #{tpu_custom_call.1} parent=141 // loop_footer
                  %s490 = sadd.s32 1, %s486
                $region148: #{tpu_custom_call.1} parent=141 // loop_footer_branch
                  %485 = sbr.rel target = $region144
                $region149: #{tpu_custom_call.1} parent=141 // loop_exit
                  _
              $region142: #{tpu_custom_call.1} parent=126 // pred_fallthru
                _
              // Predicated region
              $region150: #{tpu_custom_call.1} parent=126 // pred_check
                _
              $region151: #{tpu_custom_call.1} parent=126 // pred_check_branch
                %500 = sbr.rel target = $region153
              $region152: #{tpu_custom_call.1} parent=126 // pred_region
                _
              $region153: #{tpu_custom_call.1} parent=126 // pred_fallthru
                _
            $region127: #{tpu_custom_call.1} parent=122 // pred_fallthru
              _
            // Predicated region
            $region128: #{tpu_custom_call.1} parent=122 // pred_check
              _
            $region129: #{tpu_custom_call.1} parent=122 // pred_check_branch
              %466 = sbr.rel target = $region131
            $region130: #{tpu_custom_call.1} parent=122 // pred_region
              %s468 = ssub.s32 256, 1
              loop: start=0, step=1, limit=1
              $region132: #{tpu_custom_call.1} parent=130 // loop_pre_header
                _
              $region133: #{tpu_custom_call.1} parent=130 // loop_header
                %s470 = sphi 0, %s474
                %p471 = scmp.ge.s32.totalorder %s470, 1
                %s475 = sphi %s453, %s453
                %s476 = sphi %s460, %s460
              $region134: #{tpu_custom_call.1} parent=130 // loop_header_branch
                %473 = sbr.rel (%p471) target = $region138
              $region135: #{tpu_custom_call.1} parent=130 // loop_body
                %v477 = vld [vmem:[%s475] sm:%s468]
                %478 = vst [vmem:[%s476] sm:%s468] %v477
                %v479 = vld [vmem:[%s475 + $0x8] sm:%s468]
                %480 = vst [vmem:[%s476 + $0x10] sm:%s468] %v479
                %v481 = vld [vmem:[%s475 + $0x10] sm:%s468]
                %482 = vst [vmem:[%s476 + $0x20] sm:%s468] %v481
              $region136: #{tpu_custom_call.1} parent=130 // loop_footer
                %s474 = sadd.s32 1, %s470
              $region137: #{tpu_custom_call.1} parent=130 // loop_footer_branch
                %469 = sbr.rel target = $region133
              $region138: #{tpu_custom_call.1} parent=130 // loop_exit
                _
            $region131: #{tpu_custom_call.1} parent=122 // pred_fallthru
              _
          $region123: #{tpu_custom_call.1} parent=118 // pred_fallthru
            _
          %501 = vnop
        $region119: #{tpu_custom_call.1} parent=106 // pred_fallthru
          _
      $region107: #{tpu_custom_call.1} parent=5 // pred_fallthru
        _
      %p502 = scmp.le.s32.totalorder 2, %s10
      // Predicated region
      $region154: #{tpu_custom_call.1} parent=5 // pred_check
        %p503 = pneg %p502
      $region155: #{tpu_custom_call.1} parent=5 // pred_check_branch
        %505 = sbr.rel (%p503) target = $region157
      $region156: #{tpu_custom_call.1} parent=5 // pred_region
        %s506 = ssub.s32 %s10, 2
        // Predicated region
        $region158: #{tpu_custom_call.1} parent=156 // pred_check
          %p507 = pneg %p149
        $region159: #{tpu_custom_call.1} parent=156 // pred_check_branch
          %509 = sbr.rel (%p507) target = $region161
        $region160: #{tpu_custom_call.1} parent=156 // pred_region
          %s510 = sand.u32 %s134, 1
          %s511 = sand.u32 %s134, 1
          %s512 = smul.addr %s511, 24
          %s513 = scalar_lea.vmem [#allocation4], %s512
        $region161: #{tpu_custom_call.1} parent=156 // pred_fallthru
          _
      $region157: #{tpu_custom_call.1} parent=5 // pred_fallthru
        _
    $region6: #{tpu_custom_call.1} parent=1 // loop_footer
      %s14 = sadd.s32 1, %s10
    $region7: #{tpu_custom_call.1} parent=1 // loop_footer_branch
      %9 = sbr.rel target = $region3
    $region8: #{tpu_custom_call.1} parent=1 // loop_exit
      _

</llo_original>
